<compile_context>
chip_gen: v6e
topology: v6e:2x2x1
jax: 0.10.0
libtpu: 0.0.40
codegen_flags: <defaults>
</compile_context>

<pallas_src>
import functools

import jax
import jax.numpy as jnp
from jax.experimental import pallas as pl
from jax.experimental.pallas import tpu as pltpu


def _round_up(x, m):
    return ((x + m - 1) // m) * m


def famlp_kernel(x_ref, adj_ref, w1_ref, b1_ref, w2_ref, b2_ref, w3_ref, b3_ref,
                 o_ref):
    # Branch 1 and branch 2 (alpha already folded into weights/biases).
    z1 = jnp.dot(x_ref[...], w1_ref[...],
                 preferred_element_type=jnp.float32) + b1_ref[...]
    z2 = jnp.dot(adj_ref[...], w2_ref[...],
                 preferred_element_type=jnp.float32) + b2_ref[...]
    h = jnp.maximum(z1, 0.0) + jnp.maximum(z2, 0.0)

    # TODO(synk): F.dropout is identity in eval mode; training-mode dropout would
    # use pltpu.prng_seed / pltpu.stateful_bernoulli here.

    # Output projection (padded hidden rows of w3 are zero -> contribute nothing).
    logits = jnp.dot(h, w3_ref[...],
                     preferred_element_type=jnp.float32) + b3_ref[...]

    # log_softmax over the class axis (dim=1 in PyTorch), numerically stable.
    m = jnp.max(logits, axis=-1, keepdims=True)
    shifted = logits - m
    lse = jnp.log(jnp.sum(jnp.exp(shifted), axis=-1, keepdims=True))
    o_ref[...] = (shifted - lse).astype(o_ref.dtype)


def prepare_params(params, alpha=0.0):
    """One-time weight packing (arrays only -> jit-safe pytree).

    params uses PyTorch nn.Linear convention:
      w1:(H,Dx) b1:(H,)  w2:(H,Da) b2:(H,)  w3:(O,H) b3:(O,)
    """
    alpha = float(alpha)
    assert 0.0 <= alpha <= 1.0, "alpha folding through ReLU needs alpha in [0,1]"

    w1, b1 = params["w1"], params["b1"]
    w2, b2 = params["w2"], params["b2"]
    w3, b3 = params["w3"], params["b3"]
    h, dx = w1.shape
    _, da = w2.shape
    o = w3.shape[0]
    hp = _round_up(h, 128)        # lane-dense hidden (VMEM-only; never hits HBM)

    w1p = jnp.zeros((dx, hp), jnp.float32).at[:, :h].set(
        (alpha * w1.T).astype(jnp.float32))
    b1p = jnp.zeros((1, hp), jnp.float32).at[0, :h].set(
        (alpha * b1).astype(jnp.float32))
    w2p = jnp.zeros((da, hp), jnp.float32).at[:, :h].set(
        ((1.0 - alpha) * w2.T).astype(jnp.float32))
    b2p = jnp.zeros((1, hp), jnp.float32).at[0, :h].set(
        ((1.0 - alpha) * b2).astype(jnp.float32))
    w3p = jnp.zeros((hp, o), jnp.float32).at[:h, :].set(
        w3.T.astype(jnp.float32))
    b3p = b3.reshape(1, o).astype(jnp.float32)

    return {"w1": w1p, "b1": b1p, "w2": w2p, "b2": b2p, "w3": w3p, "b3": b3p}


@functools.partial(jax.jit, static_argnames=("block_rows",))
def famlp_forward(x, adj, prepared, *, block_rows=4096):
    """Fused FAMLP forward (eval mode).  x:(N,Dx) adj:(N,Da) -> (N, out_dim)."""
    n, dx = x.shape
    da = adj.shape[1]
    hp = prepared["w1"].shape[1]
    o = prepared["b3"].shape[1]

    # Row tile: multiple of 8, capped so the grid has >= 2 steps when N allows
    # (keeps both v7x TensorCores busy), never (much) larger than N itself.
    tile_n = min(block_rows, _round_up(pl.cdiv(n, 2), 8), _round_up(n, 8))
    tile_n = max(tile_n, 8)
    grid = (pl.cdiv(n, tile_n),)   # partial last block: reads padded, writes masked

    out = pl.pallas_call(
        famlp_kernel,
        out_shape=jax.ShapeDtypeStruct((n, o), jnp.float32),
        grid_spec=pl.GridSpec(
            grid=grid,
            in_specs=[
                pl.BlockSpec((tile_n, dx), lambda i: (i, 0)),   # streamed x rows
                pl.BlockSpec((tile_n, da), lambda i: (i, 0)),   # streamed adj rows
                pl.BlockSpec((dx, hp), lambda i: (0, 0)),       # resident W1 (alpha-folded)
                pl.BlockSpec((1, hp), lambda i: (0, 0)),        # resident b1
                pl.BlockSpec((da, hp), lambda i: (0, 0)),       # resident W2 ((1-alpha)-folded)
                pl.BlockSpec((1, hp), lambda i: (0, 0)),        # resident b2
                pl.BlockSpec((hp, o), lambda i: (0, 0)),        # resident W3
                pl.BlockSpec((1, o), lambda i: (0, 0)),         # resident b3
            ],
            out_specs=pl.BlockSpec((tile_n, o), lambda i: (i, 0)),  # narrow output
        ),
        compiler_params=pltpu.CompilerParams(
            dimension_semantics=("parallel",),       # shard row tiles across TCs
            vmem_limit_bytes=32 * 1024 * 1024,       # few-MiB footprint, ample headroom
        ),
    )(x, adj, prepared["w1"], prepared["b1"], prepared["w2"], prepared["b2"],
      prepared["w3"], prepared["b3"])

    return out


def init_params(key, in_dim_x, in_dim_adj, hidden_dim, out_dim):
    """Deterministic synthetic parameters with nn.Linear-style shapes."""
    ks = jax.random.split(key, 6)
    scale = 0.1
    return {
        "w1": scale * jax.random.normal(ks[0], (hidden_dim, in_dim_x), jnp.float32),
        "b1": scale * jax.random.normal(ks[1], (hidden_dim,), jnp.float32),
        "w2": scale * jax.random.normal(ks[2], (hidden_dim, in_dim_adj), jnp.float32),
        "b2": scale * jax.random.normal(ks[3], (hidden_dim,), jnp.float32),
        "w3": scale * jax.random.normal(ks[4], (out_dim, hidden_dim), jnp.float32),
        "b3": scale * jax.random.normal(ks[5], (out_dim,), jnp.float32),
    }


def famlp_reference(x, adj, params, alpha=0.0):
    """Pure-JAX reference (eval mode: dropout is identity)."""
    h1 = jax.nn.relu(x @ params["w1"].T + params["b1"])
    h2 = jax.nn.relu(adj @ params["w2"].T + params["b2"])
    h = alpha * h1 + (1.0 - alpha) * h2
    logits = h @ params["w3"].T + params["b3"]
    return jax.nn.log_softmax(logits, axis=1)


if __name__ == "__main__":
    IN_X, IN_ADJ, HIDDEN, OUT = 16, 8, 32, 8
    ALPHA = 0.25

    key = jax.random.PRNGKey(0)
    kx, kadj, kparam, kx2, kadj2 = jax.random.split(key, 5)
    params = init_params(kparam, IN_X, IN_ADJ, HIDDEN, OUT)
    prepared = prepare_params(params, alpha=ALPHA)   # one-time weight packing

    # Case 1: tiny N (single grid step, block == full rows).
    N1 = 8
    x1 = jax.random.normal(kx, (N1, IN_X), jnp.float32)
    adj1 = jax.random.normal(kadj, (N1, IN_ADJ), jnp.float32)
    out1 = jax.block_until_ready(famlp_forward(x1, adj1, prepared))
    ref1 = famlp_reference(x1, adj1, params, alpha=ALPHA)
    assert out1.shape == (N1, OUT)
    assert jnp.allclose(out1, ref1, atol=3e-2, rtol=3e-2), "mismatch vs reference (N=8)"

    # Case 2: N not a multiple of the tile -> multi-step grid with a masked
    # partial last block (no wrapper pad, no output slice).
    N2 = 300
    x2 = jax.random.normal(kx2, (N2, IN_X), jnp.float32)
    adj2 = jax.random.normal(kadj2, (N2, IN_ADJ), jnp.float32)
    out2 = jax.block_until_ready(famlp_forward(x2, adj2, prepared, block_rows=128))
    ref2 = famlp_reference(x2, adj2, params, alpha=ALPHA)
    assert out2.shape == (N2, OUT)
    assert jnp.allclose(out2, ref2, atol=3e-2, rtol=3e-2), "mismatch vs reference (N=300)"

    print("KERNEL_OK")
</pallas_src>

<mosaic_0001>
module attributes {stable_mosaic.version = 11 : i64} {
  func.func @famlp_kernel(%arg0: i32, %arg1: memref<8x16xf32, #tpu.memory_space<vmem>>, %arg2: memref<8x8xf32, #tpu.memory_space<vmem>>, %arg3: memref<16x128xf32, #tpu.memory_space<vmem>>, %arg4: memref<1x128xf32, #tpu.memory_space<vmem>>, %arg5: memref<8x128xf32, #tpu.memory_space<vmem>>, %arg6: memref<1x128xf32, #tpu.memory_space<vmem>>, %arg7: memref<128x8xf32, #tpu.memory_space<vmem>>, %arg8: memref<1x8xf32, #tpu.memory_space<vmem>>, %arg9: memref<8x8xf32, #tpu.memory_space<vmem>>) attributes {dimension_semantics = [#tpu.dimension_semantics<parallel>], iteration_bounds = array<i64: 1>, scalar_prefetch = 0 : i64, scratch_operands = 0 : i64, tpu.core_type = #tpu.core_type<tc>, window_params = [{transform_indices = @transform_0, window_bounds = array<i64: 8, 16>}, {transform_indices = @transform_1, window_bounds = array<i64: 8, 8>}, {pipeline_mode = #tpu.pipeline_mode<synchronous>, transform_indices = @transform_2, window_bounds = array<i64: 16, 128>}, {pipeline_mode = #tpu.pipeline_mode<synchronous>, transform_indices = @transform_3, window_bounds = array<i64: 1, 128>}, {pipeline_mode = #tpu.pipeline_mode<synchronous>, transform_indices = @transform_4, window_bounds = array<i64: 8, 128>}, {pipeline_mode = #tpu.pipeline_mode<synchronous>, transform_indices = @transform_5, window_bounds = array<i64: 1, 128>}, {pipeline_mode = #tpu.pipeline_mode<synchronous>, transform_indices = @transform_6, window_bounds = array<i64: 128, 8>}, {pipeline_mode = #tpu.pipeline_mode<synchronous>, transform_indices = @transform_7, window_bounds = array<i64: 1, 8>}, {transform_indices = @transform_8, window_bounds = array<i64: 8, 8>}]} {
    %c0 = arith.constant 0 : index
    %c0_0 = arith.constant 0 : index
    %0 = vector.load %arg1[%c0, %c0_0] : memref<8x16xf32, #tpu.memory_space<vmem>>, vector<8x16xf32>
    %c0_1 = arith.constant 0 : index
    %c0_2 = arith.constant 0 : index
    %1 = vector.load %arg3[%c0_1, %c0_2] : memref<16x128xf32, #tpu.memory_space<vmem>>, vector<16x128xf32>
    %cst = arith.constant dense<0.000000e+00> : vector<8x128xf32>
    %2 = tpu.matmul %0, %1, %cst {dimension_numbers = #tpu.dot_dimension_numbers<[1], [0], [0], [1], [0, 0, 1, 1], [], []>} : vector<8x16xf32>, vector<16x128xf32>, vector<8x128xf32> -> vector<8x128xf32>
    %c0_3 = arith.constant 0 : index
    %c0_4 = arith.constant 0 : index
    %3 = vector.load %arg4[%c0_3, %c0_4] : memref<1x128xf32, #tpu.memory_space<vmem>>, vector<1x128xf32>
    %4 = vector.broadcast %3 : vector<1x128xf32> to vector<8x128xf32>
    %5 = arith.addf %2, %4 : vector<8x128xf32>
    %c0_5 = arith.constant 0 : index
    %c0_6 = arith.constant 0 : index
    %6 = vector.load %arg2[%c0_5, %c0_6] : memref<8x8xf32, #tpu.memory_space<vmem>>, vector<8x8xf32>
    %c0_7 = arith.constant 0 : index
    %c0_8 = arith.constant 0 : index
    %7 = vector.load %arg5[%c0_7, %c0_8] : memref<8x128xf32, #tpu.memory_space<vmem>>, vector<8x128xf32>
    %cst_9 = arith.constant dense<0.000000e+00> : vector<8x128xf32>
    %8 = tpu.matmul %6, %7, %cst_9 {dimension_numbers = #tpu.dot_dimension_numbers<[1], [0], [0], [1], [0, 0, 1, 1], [], []>} : vector<8x8xf32>, vector<8x128xf32>, vector<8x128xf32> -> vector<8x128xf32>
    %c0_10 = arith.constant 0 : index
    %c0_11 = arith.constant 0 : index
    %9 = vector.load %arg6[%c0_10, %c0_11] : memref<1x128xf32, #tpu.memory_space<vmem>>, vector<1x128xf32>
    %10 = vector.broadcast %9 : vector<1x128xf32> to vector<8x128xf32>
    %11 = arith.addf %8, %10 : vector<8x128xf32>
    %cst_12 = arith.constant 0.000000e+00 : f32
    %12 = vector.broadcast %cst_12 : f32 to vector<8x128xf32>
    %13 = arith.maximumf %5, %12 : vector<8x128xf32>
    %cst_13 = arith.constant 0.000000e+00 : f32
    %14 = vector.broadcast %cst_13 : f32 to vector<8x128xf32>
    %15 = arith.maximumf %11, %14 : vector<8x128xf32>
    %16 = arith.addf %13, %15 : vector<8x128xf32>
    %c0_14 = arith.constant 0 : index
    %c0_15 = arith.constant 0 : index
    %17 = vector.load %arg7[%c0_14, %c0_15] : memref<128x8xf32, #tpu.memory_space<vmem>>, vector<128x8xf32>
    %cst_16 = arith.constant dense<0.000000e+00> : vector<8x8xf32>
    %18 = tpu.matmul %16, %17, %cst_16 {dimension_numbers = #tpu.dot_dimension_numbers<[1], [0], [0], [1], [0, 0, 1, 1], [], []>} : vector<8x128xf32>, vector<128x8xf32>, vector<8x8xf32> -> vector<8x8xf32>
    %c0_17 = arith.constant 0 : index
    %c0_18 = arith.constant 0 : index
    %19 = vector.load %arg8[%c0_17, %c0_18] : memref<1x8xf32, #tpu.memory_space<vmem>>, vector<1x8xf32>
    %20 = vector.broadcast %19 : vector<1x8xf32> to vector<8x8xf32>
    %21 = arith.addf %18, %20 : vector<8x8xf32>
    %cst_19 = arith.constant dense<0xFF800000> : vector<8xf32>
    %22 = vector.multi_reduction <maximumf>, %21, %cst_19 [1] : vector<8x8xf32> to vector<8xf32>
    %23 = vector.shape_cast %22 : vector<8xf32> to vector<8x1xf32>
    %24 = vector.broadcast %23 : vector<8x1xf32> to vector<8x8xf32>
    %25 = arith.subf %21, %24 : vector<8x8xf32>
    %26 = math.exp %25 : vector<8x8xf32>
    %cst_20 = arith.constant dense<0.000000e+00> : vector<8xf32>
    %27 = vector.multi_reduction <add>, %26, %cst_20 [1] : vector<8x8xf32> to vector<8xf32>
    %28 = vector.shape_cast %27 : vector<8xf32> to vector<8x1xf32>
    %29 = math.log %28 : vector<8x1xf32>
    %30 = vector.broadcast %29 : vector<8x1xf32> to vector<8x8xf32>
    %31 = arith.subf %25, %30 : vector<8x8xf32>
    %c0_21 = arith.constant 0 : index
    %c0_22 = arith.constant 0 : index
    %32 = vector.load %arg9[%c0_21, %c0_22] : memref<8x8xf32, #tpu.memory_space<vmem>>, vector<8x8xf32>
    tpu.vector_store %arg9[%c0_21, %c0_22], %31 {strides = array<i32>} : memref<8x8xf32, #tpu.memory_space<vmem>>, vector<8x8xf32>,
    return
  }
  func.func @transform_0(%arg0: i32) -> (i32, i32) {
    %c0_i32 = arith.constant 0 : i32
    %c0_i32_0 = arith.constant 0 : i32
    return %arg0, %c0_i32 : i32, i32
  }
  func.func @transform_1(%arg0: i32) -> (i32, i32) {
    %c0_i32 = arith.constant 0 : i32
    %c0_i32_0 = arith.constant 0 : i32
    return %arg0, %c0_i32 : i32, i32
  }
  func.func @transform_2(%arg0: i32) -> (i32, i32) {
    %c0_i32 = arith.constant 0 : i32
    %c0_i32_0 = arith.constant 0 : i32
    %c0_i32_1 = arith.constant 0 : i32
    return %c0_i32, %c0_i32_0 : i32, i32
  }
  func.func @transform_3(%arg0: i32) -> (i32, i32) {
    %c0_i32 = arith.constant 0 : i32
    %c0_i32_0 = arith.constant 0 : i32
    %c0_i32_1 = arith.constant 0 : i32
    return %c0_i32, %c0_i32_0 : i32, i32
  }
  func.func @transform_4(%arg0: i32) -> (i32, i32) {
    %c0_i32 = arith.constant 0 : i32
    %c0_i32_0 = arith.constant 0 : i32
    %c0_i32_1 = arith.constant 0 : i32
    return %c0_i32, %c0_i32_0 : i32, i32
  }
  func.func @transform_5(%arg0: i32) -> (i32, i32) {
    %c0_i32 = arith.constant 0 : i32
    %c0_i32_0 = arith.constant 0 : i32
    %c0_i32_1 = arith.constant 0 : i32
    return %c0_i32, %c0_i32_0 : i32, i32
  }
  func.func @transform_6(%arg0: i32) -> (i32, i32) {
    %c0_i32 = arith.constant 0 : i32
    %c0_i32_0 = arith.constant 0 : i32
    %c0_i32_1 = arith.constant 0 : i32
    return %c0_i32, %c0_i32_0 : i32, i32
  }
  func.func @transform_7(%arg0: i32) -> (i32, i32) {
    %c0_i32 = arith.constant 0 : i32
    %c0_i32_0 = arith.constant 0 : i32
    %c0_i32_1 = arith.constant 0 : i32
    return %c0_i32, %c0_i32_0 : i32, i32
  }
  func.func @transform_8(%arg0: i32) -> (i32, i32) {
    %c0_i32 = arith.constant 0 : i32
    %c0_i32_0 = arith.constant 0 : i32
    return %arg0, %c0_i32 : i32, i32
  }
}

</mosaic_0001>

<llo_original>
// kernel: famlp_forward.1
$region0: #{famlp_forward.1}
  #allocation0 [shape = 'u32[]', space=smem, size = 0x4, offset = 0x4, fixed_abs, tag = 'smem constant byte address 0x4 - core index']
  #allocation1 [shape = 'u32[144,128]{1,0:T(1,128)}', space=vmem, size = 0x12000, scoped, tag = 'internal scratch']
  %s0 = inlined_call_operand.vmem [shape: f32[8,16], index: 0, kind: input, shape index: {}]
  %s1 = inlined_call_operand.vmem [shape: f32[8,8], index: 1, kind: input, shape index: {}]
  %s2 = inlined_call_operand.vmem [shape: f32[16,128], index: 2, kind: input, shape index: {}]
  %s3 = inlined_call_operand.vmem [shape: f32[1,128], index: 3, kind: input, shape index: {}]
  %s4 = inlined_call_operand.vmem [shape: f32[8,128], index: 4, kind: input, shape index: {}]
  %s5 = inlined_call_operand.vmem [shape: f32[1,128], index: 5, kind: input, shape index: {}]
  %s6 = inlined_call_operand.vmem [shape: f32[128,8], index: 6, kind: input, shape index: {}]
  %s7 = inlined_call_operand.vmem [shape: f32[1,8], index: 7, kind: input, shape index: {}]
  %s8 = inlined_call_operand.hbm [shape: f32[8,8], index: 8, kind: output, shape index: {}]
  %s9 = sld [smem:[#allocation0]]
  $region42: #{famlp_forward.1} parent=0
    _
  %s11 = ssub.s32 1, %s9
  %s12 = scalar_select 0, %s11, %s9
  $region1: #{famlp_forward.1} parent=0
    #allocation2 [shape = 'u8[4096]{0}', space=vmem, size = 0x1000, scoped, tag = 'output window, operand 0, single buffered']
    #allocation3 [shape = 's32[1]{0}', space=sflag, size = 0x4, scoped, tag = 'scoped memory for famlp_forward.1']
    %13 = vsyncpa [#allocation3], 0
    // Predicated region
    $region2: #{famlp_forward.1} parent=1 // pred_check
      _
    $region3: #{famlp_forward.1} parent=1 // pred_check_branch
      %15 = sbr.rel (0) target = $region5
    $region4: #{famlp_forward.1} parent=1 // pred_region
      _
    $region5: #{famlp_forward.1} parent=1 // pred_fallthru
      _
    // Predicated region
    $region6: #{famlp_forward.1} parent=1 // pred_check
      _
    $region7: #{famlp_forward.1} parent=1 // pred_check_branch
      %17 = sbr.rel (0) target = $region9
    $region8: #{famlp_forward.1} parent=1 // pred_region
      _
    $region9: #{famlp_forward.1} parent=1 // pred_fallthru
      _
    // Predicated region
    $region10: #{famlp_forward.1} parent=1 // pred_check
      _
    $region11: #{famlp_forward.1} parent=1 // pred_check_branch
      %19 = sbr.rel (0) target = $region13
    $region12: #{famlp_forward.1} parent=1 // pred_region
      _
    $region13: #{famlp_forward.1} parent=1 // pred_fallthru
      _
    // Predicated region
    $region14: #{famlp_forward.1} parent=1 // pred_check
      _
    $region15: #{famlp_forward.1} parent=1 // pred_check_branch
      %21 = sbr.rel (0) target = $region17
    $region16: #{famlp_forward.1} parent=1 // pred_region
      _
    $region17: #{famlp_forward.1} parent=1 // pred_fallthru
      _
    // Predicated region
    $region18: #{famlp_forward.1} parent=1 // pred_check
      _
    $region19: #{famlp_forward.1} parent=1 // pred_check_branch
      %23 = sbr.rel (0) target = $region21
    $region20: #{famlp_forward.1} parent=1 // pred_region
      _
    $region21: #{famlp_forward.1} parent=1 // pred_fallthru
      _
    // Predicated region
    $region22: #{famlp_forward.1} parent=1 // pred_check
      _
    $region23: #{famlp_forward.1} parent=1 // pred_check_branch
      %25 = sbr.rel (0) target = $region25
    $region24: #{famlp_forward.1} parent=1 // pred_region
      _
    $region25: #{famlp_forward.1} parent=1 // pred_fallthru
      _
    // Predicated region
    $region26: #{famlp_forward.1} parent=1 // pred_check
      _
    $region27: #{famlp_forward.1} parent=1 // pred_check_branch
      %27 = sbr.rel (0) target = $region29
    $region28: #{famlp_forward.1} parent=1 // pred_region
      _
    $region29: #{famlp_forward.1} parent=1 // pred_fallthru
      _
    // Predicated region
    $region30: #{famlp_forward.1} parent=1 // pred_check
      _
    $region31: #{famlp_forward.1} parent=1 // pred_check_branch
      %29 = sbr.rel (0) target = $region33
    $region32: #{famlp_forward.1} parent=1 // pred_region
      _
    $region33: #{famlp_forward.1} parent=1 // pred_fallthru
      _
    %v30 = vld [vmem:[%s0] sm:$0xff]
    %v31 = vld [vmem:[%s2] sm:$0xff]
    %v32 = vld [vmem:[%s2 + $0x8] sm:$0xff]
    %v33 = vld [vmem:[%s3] sm:$0x1]
    %v35 = vlaneseq
    %v36 = vshrl.u32 %v35, 7
    %v37 = vsub.s32 0, %v36
    %v38 = vrot.slane %v33, %v37
    %vm40 = vcmask 130048
    %v42 = vsel %vm40, %v30, 0
    %44 = vmatprep.subr.mxu0 0.0
    %45 = vmatpush1.msra.mxu0 0.0
    %46 = vmatprep.subr.mxu0 0.0
    %47 = vmatpush1.msra.mxu0 0.0
    %48 = vmatprep.subr.mxu0 0.0
    %49 = vmatpush1.msra.mxu0 0.0
    %50 = vmatprep.subr.mxu0 0.0
    %51 = vmatpush1.msra.mxu0 0.0
    %52 = vmatprep.subr.mxu0 0.0
    %53 = vmatpush1.msra.mxu0 0.0
    %54 = vmatprep.subr.mxu0 0.0
    %55 = vmatpush1.msra.mxu0 0.0
    %56 = vmatprep.subr.mxu0 0.0
    %57 = vmatpush1.msra.mxu0 0.0
    %58 = vmatprep.subr.mxu0 0.0
    %59 = vmatpush1.msra.mxu0 0.0
    %60 = vmatprep.subr.mxu0 0.0
    %61 = vmatpush1.msra.mxu0 0.0
    %62 = vmatprep.subr.mxu0 0.0
    %63 = vmatpush1.msra.mxu0 0.0
    %64 = vmatprep.subr.mxu0 0.0
    %65 = vmatpush1.msra.mxu0 0.0
    %66 = vmatprep.subr.mxu0 0.0
    %67 = vmatpush1.msra.mxu0 0.0
    %68 = vmatprep.subr.mxu0 0.0
    %69 = vmatpush1.msra.mxu0 0.0
    %70 = vmatprep.subr.mxu0 0.0
    %71 = vmatpush1.msra.mxu0 0.0
    %72 = vmatprep.subr.mxu0 0.0
    %73 = vmatpush1.msra.mxu0 %v32
    %74 = vmatprep.subr.mxu0 0.0
    %75 = vmatpush1.msra.mxu0 %v31
    %76 = vmatprep.subr.mxu0 0.0
    %77 = vmatpush2.msra.mxu0 0.0
    %78 = vmatprep.subr.mxu0 0.0
    %79 = vmatpush2.msra.mxu0 0.0
    %80 = vmatprep.subr.mxu0 0.0
    %81 = vmatpush2.msra.mxu0 0.0
    %82 = vmatprep.subr.mxu0 0.0
    %83 = vmatpush2.msra.mxu0 0.0
    %84 = vmatprep.subr.mxu0 0.0
    %85 = vmatpush2.msra.mxu0 0.0
    %86 = vmatprep.subr.mxu0 0.0
    %87 = vmatpush2.msra.mxu0 0.0
    %88 = vmatprep.subr.mxu0 0.0
    %89 = vmatpush2.msra.mxu0 0.0
    %90 = vmatprep.subr.mxu0 0.0
    %91 = vmatpush2.msra.mxu0 0.0
    %92 = vmatprep.subr.mxu0 0.0
    %93 = vmatpush2.msra.mxu0 0.0
    %94 = vmatprep.subr.mxu0 0.0
    %95 = vmatpush2.msra.mxu0 0.0
    %96 = vmatprep.subr.mxu0 0.0
    %97 = vmatpush2.msra.mxu0 0.0
    %98 = vmatprep.subr.mxu0 0.0
    %99 = vmatpush2.msra.mxu0 0.0
    %100 = vmatprep.subr.mxu0 0.0
    %101 = vmatpush2.msra.mxu0 0.0
    %102 = vmatprep.subr.mxu0 0.0
    %103 = vmatpush2.msra.mxu0 0.0
    %104 = vmatprep.subr.mxu0 0.0
    %105 = vmatpush2.msra.mxu0 0.0
    %106 = vmatprep.subr.mxu0 0.0
    %107 = vmatpush2.msra.mxu0 0.0
    %108 = vmatprep.mubr.f32.mxu0 0.0
    %109 = vmatmul.mubr.f32.gmra.mxu0 %v42
    %v110 = vpop.f32.mrf.mxu0
    %v111 = vadd.f32 %v38, %v110
    %v112 = vpop.f32.mrf.mxu0
    %113 = vdwg.mxu0
    %v114 = vld [vmem:[%s1] sm:$0xff]
    %v115 = vld [vmem:[%s4] sm:$0xff]
    %v116 = vld [vmem:[%s5] sm:$0x1]
    %v118 = vlaneseq
    %v119 = vshrl.u32 %v118, 7
    %v120 = vsub.s32 0, %v119
    %v121 = vrot.slane %v116, %v120
    %vm123 = vcmask 64512
    %v125 = vsel %vm123, %v114, 0
    %127 = vmatprep.subr.mxu0 0.0
    %128 = vmatpush1.msra.mxu0 0.0
    %129 = vmatprep.subr.mxu0 0.0
    %130 = vmatpush1.msra.mxu0 0.0
    %131 = vmatprep.subr.mxu0 0.0
    %132 = vmatpush1.msra.mxu0 0.0
    %133 = vmatprep.subr.mxu0 0.0
    %134 = vmatpush1.msra.mxu0 0.0
    %135 = vmatprep.subr.mxu0 0.0
    %136 = vmatpush1.msra.mxu0 0.0
    %137 = vmatprep.subr.mxu0 0.0
    %138 = vmatpush1.msra.mxu0 0.0
    %139 = vmatprep.subr.mxu0 0.0
    %140 = vmatpush1.msra.mxu0 0.0
    %141 = vmatprep.subr.mxu0 0.0
    %142 = vmatpush1.msra.mxu0 0.0
    %143 = vmatprep.subr.mxu0 0.0
    %144 = vmatpush1.msra.mxu0 0.0
    %145 = vmatprep.subr.mxu0 0.0
    %146 = vmatpush1.msra.mxu0 0.0
    %147 = vmatprep.subr.mxu0 0.0
    %148 = vmatpush1.msra.mxu0 0.0
    %149 = vmatprep.subr.mxu0 0.0
    %150 = vmatpush1.msra.mxu0 0.0
    %151 = vmatprep.subr.mxu0 0.0
    %152 = vmatpush1.msra.mxu0 0.0
    %153 = vmatprep.subr.mxu0 0.0
    %154 = vmatpush1.msra.mxu0 0.0
    %155 = vmatprep.subr.mxu0 0.0
    %156 = vmatpush1.msra.mxu0 0.0
    %157 = vmatprep.subr.mxu0 0.0
    %158 = vmatpush1.msra.mxu0 %v115
    %159 = vmatprep.subr.mxu0 0.0
    %160 = vmatpush2.msra.mxu0 0.0
    %161 = vmatprep.subr.mxu0 0.0
    %162 = vmatpush2.msra.mxu0 0.0
    %163 = vmatprep.subr.mxu0 0.0
    %164 = vmatpush2.msra.mxu0 0.0
    %165 = vmatprep.subr.mxu0 0.0
    %166 = vmatpush2.msra.mxu0 0.0
    %167 = vmatprep.subr.mxu0 0.0
    %168 = vmatpush2.msra.mxu0 0.0
    %169 = vmatprep.subr.mxu0 0.0
    %170 = vmatpush2.msra.mxu0 0.0
    %171 = vmatprep.subr.mxu0 0.0
    %172 = vmatpush2.msra.mxu0 0.0
    %173 = vmatprep.subr.mxu0 0.0
    %174 = vmatpush2.msra.mxu0 0.0
    %175 = vmatprep.subr.mxu0 0.0
    %176 = vmatpush2.msra.mxu0 0.0
    %177 = vmatprep.subr.mxu0 0.0
    %178 = vmatpush2.msra.mxu0 0.0
    %179 = vmatprep.subr.mxu0 0.0
    %180 = vmatpush2.msra.mxu0 0.0
    %181 = vmatprep.subr.mxu0 0.0
    %182 = vmatpush2.msra.mxu0 0.0
    %183 = vmatprep.subr.mxu0 0.0
    %184 = vmatpush2.msra.mxu0 0.0
    %185 = vmatprep.subr.mxu0 0.0
    %186 = vmatpush2.msra.mxu0 0.0
    %187 = vmatprep.subr.mxu0 0.0
    %188 = vmatpush2.msra.mxu0 0.0
    %189 = vmatprep.subr.mxu0 0.0
    %190 = vmatpush2.msra.mxu0 0.0
    %191 = vmatprep.mubr.f32.mxu0 0.0
    %192 = vmatmul.mubr.f32.gmra.mxu0 %v125
    %v193 = vpop.f32.mrf.mxu0
    %v194 = vadd.f32 %v121, %v193
    %v195 = vpop.f32.mrf.mxu0
    %196 = vdwg.mxu0
    %v197 = vmax.f32 %v111, 0.0
    %v198 = vmax.f32 %v194, 0.0
    %v199 = vadd.f32 %v197, %v198
    %v200 = vld [vmem:[%s6] sm:$0xff]
    %v201 = vld [vmem:[%s6 + $0x8] sm:$0xff]
    %v202 = vld [vmem:[%s6 + $0x10] sm:$0xff]
    %v203 = vld [vmem:[%s6 + $0x18] sm:$0xff]
    %v204 = vld [vmem:[%s6 + $0x20] sm:$0xff]
    %v205 = vld [vmem:[%s6 + $0x28] sm:$0xff]
    %v206 = vld [vmem:[%s6 + $0x30] sm:$0xff]
    %v207 = vld [vmem:[%s6 + $0x38] sm:$0xff]
    %v208 = vld [vmem:[%s6 + $0x40] sm:$0xff]
    %v209 = vld [vmem:[%s6 + $0x48] sm:$0xff]
    %v210 = vld [vmem:[%s6 + $0x50] sm:$0xff]
    %v211 = vld [vmem:[%s6 + $0x58] sm:$0xff]
    %v212 = vld [vmem:[%s6 + $0x60] sm:$0xff]
    %v213 = vld [vmem:[%s6 + $0x68] sm:$0xff]
    %v214 = vld [vmem:[%s6 + $0x70] sm:$0xff]
    %v215 = vld [vmem:[%s6 + $0x78] sm:$0xff]
    %v216 = vld [vmem:[%s7] sm:$0x1]
    %v218 = vlaneseq
    %v219 = vshrl.u32 %v218, 7
    %v220 = vsub.s32 0, %v219
    %v221 = vrot.slane %v216, %v220
    %223 = vmatprep.subr.mxu0 0.0
    %224 = vmatpush1.msra.mxu0 %v215
    %225 = vmatprep.subr.mxu0 0.0
    %226 = vmatpush1.msra.mxu0 %v214
    %227 = vmatprep.subr.mxu0 0.0
    %228 = vmatpush1.msra.mxu0 %v213
    %229 = vmatprep.subr.mxu0 0.0
    %230 = vmatpush1.msra.mxu0 %v212
    %231 = vmatprep.subr.mxu0 0.0
    %232 = vmatpush1.msra.mxu0 %v211
    %233 = vmatprep.subr.mxu0 0.0
    %234 = vmatpush1.msra.mxu0 %v210
    %235 = vmatprep.subr.mxu0 0.0
    %236 = vmatpush1.msra.mxu0 %v209
    %237 = vmatprep.subr.mxu0 0.0
    %238 = vmatpush1.msra.mxu0 %v208
    %239 = vmatprep.subr.mxu0 0.0
    %240 = vmatpush1.msra.mxu0 %v207
    %241 = vmatprep.subr.mxu0 0.0
    %242 = vmatpush1.msra.mxu0 %v206
    %243 = vmatprep.subr.mxu0 0.0
    %244 = vmatpush1.msra.mxu0 %v205
    %245 = vmatprep.subr.mxu0 0.0
    %246 = vmatpush1.msra.mxu0 %v204
    %247 = vmatprep.subr.mxu0 0.0
    %248 = vmatpush1.msra.mxu0 %v203
    %249 = vmatprep.subr.mxu0 0.0
    %250 = vmatpush1.msra.mxu0 %v202
    %251 = vmatprep.subr.mxu0 0.0
    %252 = vmatpush1.msra.mxu0 %v201
    %253 = vmatprep.subr.mxu0 0.0
    %254 = vmatpush1.msra.mxu0 %v200
    %255 = vmatprep.subr.mxu0 0.0
    %256 = vmatpush2.msra.mxu0 0.0
    %257 = vmatprep.subr.mxu0 0.0
    %258 = vmatpush2.msra.mxu0 0.0
    %259 = vmatprep.subr.mxu0 0.0
    %260 = vmatpush2.msra.mxu0 0.0
    %261 = vmatprep.subr.mxu0 0.0
    %262 = vmatpush2.msra.mxu0 0.0
    %263 = vmatprep.subr.mxu0 0.0
    %264 = vmatpush2.msra.mxu0 0.0
    %265 = vmatprep.subr.mxu0 0.0
    %266 = vmatpush2.msra.mxu0 0.0
    %267 = vmatprep.subr.mxu0 0.0
    %268 = vmatpush2.msra.mxu0 0.0
    %269 = vmatprep.subr.mxu0 0.0
    %270 = vmatpush2.msra.mxu0 0.0
    %271 = vmatprep.subr.mxu0 0.0
    %272 = vmatpush2.msra.mxu0 0.0
    %273 = vmatprep.subr.mxu0 0.0
    %274 = vmatpush2.msra.mxu0 0.0
    %275 = vmatprep.subr.mxu0 0.0
    %276 = vmatpush2.msra.mxu0 0.0
    %277 = vmatprep.subr.mxu0 0.0
    %278 = vmatpush2.msra.mxu0 0.0
    %279 = vmatprep.subr.mxu0 0.0
    %280 = vmatpush2.msra.mxu0 0.0
    %281 = vmatprep.subr.mxu0 0.0
    %282 = vmatpush2.msra.mxu0 0.0
    %283 = vmatprep.subr.mxu0 0.0
    %284 = vmatpush2.msra.mxu0 0.0
    %285 = vmatprep.subr.mxu0 0.0
    %286 = vmatpush2.msra.mxu0 0.0
    %287 = vmatprep.mubr.f32.mxu0 0.0
    %288 = vmatmul.mubr.f32.gmra.mxu0 %v199
    %v289 = vpop.f32.mrf.mxu0
    %v290 = vadd.f32 %v221, %v289
    %v291 = vpop.f32.mrf.mxu0
    %292 = vdwg.mxu0
    %v293 = vsel %vm123, %v290, -inf
    %294 = vmax.xlane.f32.xlu0 %v293
    %v295 = vpop.xlane.xlu0 %294
    %v296 = vsub.f32 %v290, %v295
    %v297 = vmul.f32 %v296, 1.442695
    %v298 = vpow.pop %v297
    %v299 = vsel %vm123, %v298, 0.0
    %300 = vadd.xlane.f32.xlu0 %v299
    %v301 = vpop.xlane.xlu0 %300
    %v302 = vlog2.pop %v301
    %v303 = vmul.f32 %v302, 0.6931472
    %v304 = vsub.f32 %v296, %v303
    %305 = vst.msk [vmem:[#allocation2] sm:$0xff] %vm123, %v304
    // Predicated region
    $region34: #{famlp_forward.1} parent=1 // pred_check
      _
    $region35: #{famlp_forward.1} parent=1 // pred_check_branch
      %307 = sbr.rel (0) target = $region37
    $region36: #{famlp_forward.1} parent=1 // pred_region
      %s309 = ssub.s32 128, 128
      %310 = vsyncadd [#allocation3], %s309
      %s312 = sshll.u32 [#allocation2], 4
      %s313 = int_to_ptr.vmem [resolvable:$true] %s312
      %315 = dma.vmem_to_hbm [thread:$0]  %s313, 128, %s8, [#allocation3]
    $region37: #{famlp_forward.1} parent=1 // pred_fallthru
      _
    // Predicated region
    $region38: #{famlp_forward.1} parent=1 // pred_check
      _
    $region39: #{famlp_forward.1} parent=1 // pred_check_branch
      %317 = sbr.rel (0) target = $region41
    $region40: #{famlp_forward.1} parent=1 // pred_region
      %318 = dma.done [#allocation3], 128
    $region41: #{famlp_forward.1} parent=1 // pred_fallthru
      _
    %319 = vsyncpa [#allocation3], 1

</llo_original>
